<compile_context>
chip_gen: v6e
topology: v6e:2x2x1
jax: 0.10.0
libtpu: 0.0.40
codegen_flags: <defaults>
</compile_context>

<pallas_src>
import jax
import jax.numpy as jnp
from jax.experimental import pallas as pl
from jax.experimental.pallas import tpu as pltpu

_LANE = 128
_SUB = 8
_MAX_ROW_TILE = 1024  # 1024 rows * 128 lanes * 4 B = 512 KiB f32 per input buffer


def _hybrid_partial_kernel(p_ref, t_ref, out_ref):
    """Accumulate sum((pred - targ)^2) for one (pair, row-tile) grid step.

    out_ref is a (1, 8, 128) f32 block that stays resident in VMEM across the
    row-tile (reduction) axis and holds lane/sublane partial sums for the pair.
    """
    r = pl.program_id(1)

    @pl.when(r == 0)
    def _():
        out_ref[...] = jnp.zeros_like(out_ref)

    diff = p_ref[0].astype(jnp.float32) - t_ref[0].astype(jnp.float32)
    sq = diff * diff  # (row_tile, 128) f32
    # Fold sublane groups into the (8,128) accumulator: pure VPU vreg adds,
    # no cross-lane reduce, no scalar round trip per step.
    out_ref[0] += jnp.sum(sq.reshape(-1, _SUB, _LANE), axis=0)


def hybrid_loss(predictions, targets, *, alpha=0.5, T=10):
    """predictions, targets: [T_full, B, C, H, W]; returns scalar f32 loss."""
    assert predictions.shape[1:] == targets.shape[1:]
    assert predictions.shape[0] >= T and targets.shape[0] >= T

    n_elems = 1
    for d in predictions.shape[1:]:
        n_elems *= d

    # Lane-dense layout: each slice flattened to [rows, 128]. rows is rounded
    # up to a multiple of 8 (and of the row tile when tiled) so every block
    # satisfies the (8,128) constraint without masking.
    unit = _SUB * _LANE
    rows = -(-n_elems // unit) * _SUB  # multiple of 8
    if rows > _MAX_ROW_TILE:
        row_tile = _MAX_ROW_TILE
        rows = -(-rows // row_tile) * row_tile
    else:
        row_tile = rows
    num_row_tiles = rows // row_tile
    padded = rows * _LANE

    def _prep(x):
        # Keep the original dtype: the kernel upcasts per block, avoiding an
        # HBM-doubling wrapper cast. Pad only when the size is ragged.
        x = x.reshape(x.shape[0], n_elems)
        if padded != n_elems:
            x = jnp.pad(x, ((0, 0), (0, padded - n_elems)))
        return x.reshape(x.shape[0], rows, _LANE)

    p = _prep(predictions)
    t = _prep(targets)
    T_pred = p.shape[0]
    Tn = int(T)

    # Pair tp == 0  -> (pred[-1],   targ[0])   weight 1.0
    # Pair tp >= 1  -> (pred[tp-1], targ[tp])  weight alpha
    pred_spec = pl.BlockSpec(
        (1, row_tile, _LANE),
        lambda tp, r: (jnp.where(tp == 0, T_pred - 1, tp - 1), r, 0),
    )
    targ_spec = pl.BlockSpec(
        (1, row_tile, _LANE),
        lambda tp, r: (jnp.where(tp == 0, 0, tp), r, 0),
    )
    out_spec = pl.BlockSpec((1, _SUB, _LANE), lambda tp, r: (tp, 0, 0))

    p_bytes = jnp.dtype(predictions.dtype).itemsize
    t_bytes = jnp.dtype(targets.dtype).itemsize
    tile_bytes = row_tile * _LANE * max(p_bytes, t_bytes)
    # 2 inputs x 2 pipeline buffers x tile + output blocks + generous headroom.
    vmem_limit = int(min(32 << 20, 2 * 2 * tile_bytes + (8 << 20)))

    cost = pl.CostEstimate(
        flops=3 * Tn * rows * _LANE,
        transcendentals=0,
        bytes_accessed=Tn * rows * _LANE * (p_bytes + t_bytes)
        + Tn * _SUB * _LANE * 4,
    )

    partials = pl.pallas_call(
        _hybrid_partial_kernel,
        out_shape=jax.ShapeDtypeStruct((Tn, _SUB, _LANE), jnp.float32),
        grid_spec=pltpu.PrefetchScalarGridSpec(
            num_scalar_prefetch=0,
            grid=(Tn, num_row_tiles),
            in_specs=[pred_spec, targ_spec],
            out_specs=out_spec,
        ),
        compiler_params=pltpu.CompilerParams(
            dimension_semantics=("parallel", "arbitrary"),
            vmem_limit_bytes=vmem_limit,
        ),
        cost_estimate=cost,
    )(p, t)

    # Tiny final reduction + weighting in JAX (Tn * 8 * 128 f32 values).
    per_pair = jnp.sum(partials, axis=(1, 2))  # (Tn,)
    weights = jnp.concatenate(
        [jnp.ones((1,), jnp.float32), jnp.full((Tn - 1,), alpha, jnp.float32)]
    )
    return jnp.dot(per_pair, weights) / jnp.float32(n_elems)


def hybrid_loss_ref(predictions, targets, *, alpha=0.5, T=10):
    """Pure-JAX reference mirroring the PyTorch module exactly."""
    preds = predictions.astype(jnp.float32)
    targs = targets.astype(jnp.float32)
    loss = jnp.mean((preds[-1] - targs[0]) ** 2)
    for t in range(1, T):
        loss = loss + alpha * jnp.mean((preds[t - 1] - targs[t]) ** 2)
    return loss


if __name__ == "__main__":
    key = jax.random.PRNGKey(0)
    kp, kt, kp2, kt2 = jax.random.split(key, 4)

    # Case 1: f32, sequence length == T (typical diffusion-sequence usage).
    T, B, C, H, W = 10, 2, 4, 16, 16
    preds = jax.random.normal(kp, (T, B, C, H, W), dtype=jnp.float32)
    targs = jax.random.normal(kt, (T, B, C, H, W), dtype=jnp.float32)
    loss = jax.block_until_ready(hybrid_loss(preds, targs, alpha=0.5, T=T))
    ref = hybrid_loss_ref(preds, targs, alpha=0.5, T=T)
    assert jnp.allclose(loss, ref, rtol=1e-5, atol=1e-5), (loss, ref)

    # Case 2: bf16 inputs with sequence length > T — exercises the preds[-1]
    # pairing semantics and the no-upcast streaming path.
    T2, T_full = 6, 8
    preds2 = jax.random.normal(kp2, (T_full, B, C, H, W), dtype=jnp.bfloat16)
    targs2 = jax.random.normal(kt2, (T_full, B, C, H, W), dtype=jnp.bfloat16)
    loss2 = jax.block_until_ready(hybrid_loss(preds2, targs2, alpha=0.5, T=T2))
    ref2 = hybrid_loss_ref(preds2, targs2, alpha=0.5, T=T2)
    assert jnp.allclose(loss2, ref2, rtol=1e-3, atol=1e-3), (loss2, ref2)

    print("KERNEL_OK")
</pallas_src>

<mosaic_0001>
module attributes {stable_mosaic.version = 11 : i64} {
  func.func @_hybrid_partial_kernel(%arg0: i32, %arg1: i32, %arg2: memref<1x16x128xf32, #tpu.memory_space<vmem>>, %arg3: memref<1x16x128xf32, #tpu.memory_space<vmem>>, %arg4: memref<1x8x128xf32, #tpu.memory_space<vmem>>) attributes {dimension_semantics = [#tpu.dimension_semantics<parallel>, #tpu.dimension_semantics<arbitrary>], iteration_bounds = array<i64: 10, 1>, scalar_prefetch = 0 : i64, scratch_operands = 0 : i64, tpu.core_type = #tpu.core_type<tc>, window_params = [{transform_indices = @transform_0, window_bounds = array<i64: 1, 16, 128>}, {transform_indices = @transform_1, window_bounds = array<i64: 1, 16, 128>}, {transform_indices = @transform_2, window_bounds = array<i64: 1, 8, 128>}]} {
    %c0_i32 = arith.constant 0 : i32
    %0 = arith.cmpi eq, %arg1, %c0_i32 : i32
    %1 = arith.extui %0 : i1 to i32
    %c0_i32_0 = arith.constant 0 : i32
    %2 = arith.cmpi ne, %1, %c0_i32_0 : i32
    scf.if %2 {
      %cst_12 = arith.constant 0.000000e+00 : f32
      %17 = vector.broadcast %cst_12 : f32 to vector<1x8x128xf32>
      %c0_13 = arith.constant 0 : index
      %c0_14 = arith.constant 0 : index
      %c0_15 = arith.constant 0 : index
      %18 = vector.load %arg4[%c0_13, %c0_14, %c0_15] : memref<1x8x128xf32, #tpu.memory_space<vmem>>, vector<1x8x128xf32>
      tpu.vector_store %arg4[%c0_13, %c0_14, %c0_15], %17 {strides = array<i32>} : memref<1x8x128xf32, #tpu.memory_space<vmem>>, vector<1x8x128xf32>,
    } else {
    }
    %c0 = arith.constant 0 : index
    %c0_1 = arith.constant 0 : index
    %c0_2 = arith.constant 0 : index
    %3 = vector.load %arg2[%c0, %c0_1, %c0_2] : memref<1x16x128xf32, #tpu.memory_space<vmem>>, vector<1x16x128xf32>
    %4 = vector.shape_cast %3 : vector<1x16x128xf32> to vector<16x128xf32>
    %c0_3 = arith.constant 0 : index
    %c0_4 = arith.constant 0 : index
    %c0_5 = arith.constant 0 : index
    %5 = vector.load %arg3[%c0_3, %c0_4, %c0_5] : memref<1x16x128xf32, #tpu.memory_space<vmem>>, vector<1x16x128xf32>
    %6 = vector.shape_cast %5 : vector<1x16x128xf32> to vector<16x128xf32>
    %7 = arith.subf %4, %6 : vector<16x128xf32>
    %8 = arith.mulf %7, %7 : vector<16x128xf32>
    %c0_6 = arith.constant 0 : index
    %c0_7 = arith.constant 0 : index
    %c0_8 = arith.constant 0 : index
    %9 = vector.load %arg4[%c0_6, %c0_7, %c0_8] : memref<1x8x128xf32, #tpu.memory_space<vmem>>, vector<1x8x128xf32>
    %10 = vector.shape_cast %9 : vector<1x8x128xf32> to vector<8x128xf32>
    %11 = vector.shape_cast %8 : vector<16x128xf32> to vector<2x8x128xf32>
    %cst = arith.constant dense<0.000000e+00> : vector<8x128xf32>
    %12 = vector.multi_reduction <add>, %11, %cst [0] : vector<2x8x128xf32> to vector<8x128xf32>
    %13 = arith.addf %10, %12 : vector<8x128xf32>
    %c0_9 = arith.constant 0 : index
    %c0_10 = arith.constant 0 : index
    %c0_11 = arith.constant 0 : index
    %14 = vector.load %arg4[%c0_9, %c0_10, %c0_11] : memref<1x8x128xf32, #tpu.memory_space<vmem>>, vector<1x8x128xf32>
    %15 = vector.shape_cast %14 : vector<1x8x128xf32> to vector<8x128xf32>
    %16 = vector.shape_cast %13 : vector<8x128xf32> to vector<1x8x128xf32>
    tpu.vector_store %arg4[%c0_9, %c0_10, %c0_11], %16 {strides = array<i32>} : memref<1x8x128xf32, #tpu.memory_space<vmem>>, vector<1x8x128xf32>,
    return
  }
  func.func @transform_0(%arg0: i32, %arg1: i32) -> (i32, i32, i32) {
    %c0_i32 = arith.constant 0 : i32
    %0 = arith.cmpi eq, %arg0, %c0_i32 : i32
    %c1_i32 = arith.constant 1 : i32
    %1 = arith.subi %arg0, %c1_i32 : i32
    %c9_i32 = arith.constant 9 : i32
    %2 = arith.select %0, %c9_i32, %1 : i32
    %c0_i32_0 = arith.constant 0 : i32
    %c0_i32_1 = arith.constant 0 : i32
    return %2, %arg1, %c0_i32_0 : i32, i32, i32
  }
  func.func @transform_1(%arg0: i32, %arg1: i32) -> (i32, i32, i32) {
    %c0_i32 = arith.constant 0 : i32
    %0 = arith.cmpi eq, %arg0, %c0_i32 : i32
    %c0_i32_0 = arith.constant 0 : i32
    %1 = arith.select %0, %c0_i32_0, %arg0 : i32
    %c0_i32_1 = arith.constant 0 : i32
    %c0_i32_2 = arith.constant 0 : i32
    return %1, %arg1, %c0_i32_1 : i32, i32, i32
  }
  func.func @transform_2(%arg0: i32, %arg1: i32) -> (i32, i32, i32) {
    %c0_i32 = arith.constant 0 : i32
    %c0_i32_0 = arith.constant 0 : i32
    %c0_i32_1 = arith.constant 0 : i32
    return %arg0, %c0_i32, %c0_i32_0 : i32, i32, i32
  }
}

</mosaic_0001>

<llo_original>
// kernel: tpu_custom_call.1
$region0: #{tpu_custom_call.1}
  #allocation0 [shape = 'u32[]', space=smem, size = 0x4, offset = 0x4, fixed_abs, tag = 'smem constant byte address 0x4 - core index']
  #allocation1 [shape = 'u32[144,128]{1,0:T(1,128)}', space=vmem, size = 0x12000, scoped, tag = 'internal scratch']
  %s0 = inlined_call_operand.hbm [shape: f32[10,16,128], index: 0, kind: input, shape index: {}]
  %s1 = inlined_call_operand.hbm [shape: f32[10,16,128], index: 1, kind: input, shape index: {}]
  %s2 = inlined_call_operand.hbm [shape: f32[10,8,128], index: 2, kind: output, shape index: {}]
  %s3 = sld [smem:[#allocation0]]
  $region53: #{tpu_custom_call.1} parent=0
    _
  %s5 = ssub.s32 1, %s3
  %s6 = scalar_select 0, %s5, %s3
  $region1: #{tpu_custom_call.1} parent=0
    #allocation2 [shape = 'u8[16384]{0}', space=vmem, size = 0x4000, scoped, tag = 'input window, operand 0']
    #allocation3 [shape = 's32[2]{0}', space=sflag, size = 0x8, scoped, tag = 'scoped memory for tpu_custom_call.1']
    #allocation4 [shape = 's32[2]{0}', space=sflag, size = 0x8, scoped, tag = 'scoped memory for tpu_custom_call.1']
    #allocation5 [shape = 'u8[16384]{0}', space=vmem, size = 0x4000, scoped, tag = 'input window, operand 1']
    #allocation6 [shape = 's32[2]{0}', space=sflag, size = 0x8, scoped, tag = 'scoped memory for tpu_custom_call.1']
    #allocation7 [shape = 'u8[8192]{0}', space=vmem, size = 0x2000, scoped, tag = 'output window, operand 0']
    %7 = vsyncpa [#allocation3], 0
    %s8 = scalar_lea.sflag [#allocation3], 1
    %9 = vsyncpa %s8, 0
    %10 = vsyncpa [#allocation6], 0
    %s11 = scalar_lea.sflag [#allocation6], 1
    %12 = vsyncpa %s11, 0
    %13 = vsyncpa [#allocation4], 0
    %s14 = scalar_lea.sflag [#allocation4], 1
    %15 = vsyncpa %s14, 0
    loop: start=0, step=1, limit=12
    $region2: #{tpu_custom_call.1} parent=1 // loop_pre_header
      _
    $region3: #{tpu_custom_call.1} parent=1 // loop_header
      %s17 = sphi 0, %s21
      %p18 = scmp.ge.s32.totalorder %s17, 12
      %s24 = sphi 0, %s36
      %s25 = sphi 0, %s32
      %s26 = sphi 0, %s24
      %s27 = sphi 0, %s25
      %s28 = sphi 0, %s26
      %s29 = sphi 0, %s27
      %s47 = sphi 0, %s49
      %s50 = sphi 0, %s47
      %s51 = sphi 0, %s50
      %s67 = sphi 0, %s51
      %s75 = sphi 0, %s77
      %s78 = sphi 0, %s75
      %s79 = sphi 0, %s78
      %s95 = sphi 0, %s79
      %s101 = sphi 0, %s103
      %s104 = sphi 0, %s101
      %s105 = sphi 0, %s104
      %s121 = sphi 0, %s105
    $region4: #{tpu_custom_call.1} parent=1 // loop_header_branch
      %20 = sbr.rel (%p18) target = $region8
    $region5: #{tpu_custom_call.1} parent=1 // loop_body
      %s22 = ssub.s32 %s17, 1
      %s23 = ssub.s32 %s17, 2
      %s30 = sadd.s32 1, %s25
      %p31 = scmp.ge.s32.totalorder %s30, 1
      %s32 = scalar_select %p31, 0, %s30
      %s33 = sadd.s32 1, %s24
      %s34 = scalar_select %p31, %s33, %s24
      %p35 = scmp.ge.s32.totalorder %s34, 10
      %s36 = scalar_select %p35, 0, %s34
      %p37 = scmp.eq.s32.totalorder %s24, 0
      %s38 = ssub.s32 %s24, 1
      %s39 = scalar_select %p37, 9, %s38
      %p40 = scmp.eq.s32.totalorder %s36, 0
      %s41 = ssub.s32 %s36, 1
      %s42 = scalar_select %p40, 9, %s41
      %s43 = ssub.s32 %s39, %s42
      %s44 = ssub.s32 %s25, %s32
      %s45 = sor.u32 %s43, %s44
      %p46 = scmp.eq.s32.totalorder %s45, 0
      %s48 = sadd.s32 %s47, 1
      %s49 = scalar_select %p46, %s47, %s48
      %p52 = pneg %p46
      %p53 = scmp.eq.s32.totalorder %s17, 9
      %p54 = por %p52, %p53
      %p55 = scmp.ne.s32.totalorder %s47, %s50
      %p56 = scmp.eq.s32.totalorder %s17, 0
      %p57 = por %p55, %p56
      %p58 = scmp.ne.s32.totalorder %s47, %s50
      %p59 = scmp.eq.s32.totalorder %s22, 9
      %p60 = por %p58, %p59
      %p61 = scmp.ne.s32.totalorder %s50, %s51
      %p62 = scmp.eq.s32.totalorder %s22, 0
      %p63 = por %p61, %p62
      %p64 = scmp.ne.s32.totalorder %s50, %s51
      %p65 = scmp.eq.s32.totalorder %s23, 9
      %p66 = por %p64, %p65
      %p68 = scmp.ne.s32.totalorder %s51, %s67
      %p69 = scmp.eq.s32.totalorder %s23, 0
      %p70 = por %p68, %p69
      %s71 = ssub.s32 %s24, %s36
      %s72 = ssub.s32 %s25, %s32
      %s73 = sor.u32 %s71, %s72
      %p74 = scmp.eq.s32.totalorder %s73, 0
      %s76 = sadd.s32 %s75, 1
      %s77 = scalar_select %p74, %s75, %s76
      %p80 = pneg %p74
      %p81 = scmp.eq.s32.totalorder %s17, 9
      %p82 = por %p80, %p81
      %p83 = scmp.ne.s32.totalorder %s75, %s78
      %p84 = scmp.eq.s32.totalorder %s17, 0
      %p85 = por %p83, %p84
      %p86 = scmp.ne.s32.totalorder %s75, %s78
      %p87 = scmp.eq.s32.totalorder %s22, 9
      %p88 = por %p86, %p87
      %p89 = scmp.ne.s32.totalorder %s78, %s79
      %p90 = scmp.eq.s32.totalorder %s22, 0
      %p91 = por %p89, %p90
      %p92 = scmp.ne.s32.totalorder %s78, %s79
      %p93 = scmp.eq.s32.totalorder %s23, 9
      %p94 = por %p92, %p93
      %p96 = scmp.ne.s32.totalorder %s79, %s95
      %p97 = scmp.eq.s32.totalorder %s23, 0
      %p98 = por %p96, %p97
      %s99 = ssub.s32 %s24, %s36
      %p100 = scmp.eq.s32.totalorder %s99, 0
      %s102 = sadd.s32 %s101, 1
      %s103 = scalar_select %p100, %s101, %s102
      %p106 = pneg %p100
      %p107 = scmp.eq.s32.totalorder %s17, 9
      %p108 = por %p106, %p107
      %p109 = scmp.ne.s32.totalorder %s101, %s104
      %p110 = scmp.eq.s32.totalorder %s17, 0
      %p111 = por %p109, %p110
      %p112 = scmp.ne.s32.totalorder %s101, %s104
      %p113 = scmp.eq.s32.totalorder %s22, 9
      %p114 = por %p112, %p113
      %p115 = scmp.ne.s32.totalorder %s104, %s105
      %p116 = scmp.eq.s32.totalorder %s22, 0
      %p117 = por %p115, %p116
      %p118 = scmp.ne.s32.totalorder %s104, %s105
      %p119 = scmp.eq.s32.totalorder %s23, 9
      %p120 = por %p118, %p119
      %p122 = scmp.ne.s32.totalorder %s105, %s121
      %p123 = scmp.eq.s32.totalorder %s23, 0
      %p124 = por %p122, %p123
      %p125 = scmp.le.s32.totalorder 1, %s17
      %p126 = scmp.lt.s32.totalorder %s17, 11
      %p127 = pnand %p125, %p126
      %p128 = pneg %p127
      // Predicated region
      $region9: #{tpu_custom_call.1} parent=5 // pred_check
        _
      $region10: #{tpu_custom_call.1} parent=5 // pred_check_branch
        %130 = sbr.rel (%p127) target = $region12
      $region11: #{tpu_custom_call.1} parent=5 // pred_region
        %s131 = ssub.s32 %s17, 1
      $region12: #{tpu_custom_call.1} parent=5 // pred_fallthru
        _
      %p132 = scmp.lt.s32.totalorder %s17, 10
      // Predicated region
      $region13: #{tpu_custom_call.1} parent=5 // pred_check
        %p133 = pneg %p132
      $region14: #{tpu_custom_call.1} parent=5 // pred_check_branch
        %135 = sbr.rel (%p133) target = $region16
      $region15: #{tpu_custom_call.1} parent=5 // pred_region
        // Predicated region
        $region17: #{tpu_custom_call.1} parent=15 // pred_check
          %p136 = pneg %p57
        $region18: #{tpu_custom_call.1} parent=15 // pred_check_branch
          %138 = sbr.rel (%p136) target = $region20
        $region19: #{tpu_custom_call.1} parent=15 // pred_region
          %s139 = sand.u32 %s47, 1
          %s140 = scalar_lea.sflag [#allocation3], %s139
          %s141 = sand.u32 %s47, 1
          %s142 = smul.addr %s141, 16
          %s143 = scalar_lea.vmem [#allocation2], %s142
          %p144 = scmp.eq.s32.totalorder %s24, 0
          %s145 = ssub.s32 %s24, 1
          %s146 = scalar_select %p144, 9, %s145
          %s147 = smul.u32 2, %s25
          %s149 = ssub.s32 256, 256
          %150 = vsyncadd %s140, %s149
          %s151 = smul.addr %s146, 2
          %s152 = sadd.s32 %s147, %s151
          %s153 = smul.addr %s152, 128
          %s154 = scalar_lea.hbm %s0, %s153
          %s155 = sshll.u32 %s143, 4
          %s156 = int_to_ptr.vmem [resolvable:$true] %s155
          %161 = dma.hbm_to_vmem [thread:$0]  %s154, 256, %s156, %s140, 128, 128, 8
        $region20: #{tpu_custom_call.1} parent=15 // pred_fallthru
          _
        // Predicated region
        $region21: #{tpu_custom_call.1} parent=15 // pred_check
          %p162 = pneg %p85
        $region22: #{tpu_custom_call.1} parent=15 // pred_check_branch
          %164 = sbr.rel (%p162) target = $region24
        $region23: #{tpu_custom_call.1} parent=15 // pred_region
          %s165 = sand.u32 %s75, 1
          %s166 = scalar_lea.sflag [#allocation6], %s165
          %s167 = sand.u32 %s75, 1
          %s168 = smul.addr %s167, 16
          %s169 = scalar_lea.vmem [#allocation5], %s168
          %s170 = smul.u32 2, %s25
          %s172 = ssub.s32 256, 256
          %173 = vsyncadd %s166, %s172
          %s174 = smul.addr %s24, 2
          %s175 = sadd.s32 %s170, %s174
          %s176 = smul.addr %s175, 128
          %s177 = scalar_lea.hbm %s1, %s176
          %s178 = sshll.u32 %s169, 4
          %s179 = int_to_ptr.vmem [resolvable:$true] %s178
          %184 = dma.hbm_to_vmem [thread:$0]  %s177, 256, %s179, %s166, 128, 128, 8
        $region24: #{tpu_custom_call.1} parent=15 // pred_fallthru
          _
      $region16: #{tpu_custom_call.1} parent=5 // pred_fallthru
        _
      %p185 = scmp.le.s32.totalorder 1, %s17
      %p186 = scmp.lt.s32.totalorder %s17, 11
      %p187 = pnand %p185, %p186
      %p188 = pneg %p187
      // Predicated region
      $region25: #{tpu_custom_call.1} parent=5 // pred_check
        _
      $region26: #{tpu_custom_call.1} parent=5 // pred_check_branch
        %190 = sbr.rel (%p187) target = $region28
      $region27: #{tpu_custom_call.1} parent=5 // pred_region
        %s191 = ssub.s32 %s17, 1
        %s192 = sand.u32 %s50, 1
        %s193 = scalar_lea.sflag [#allocation3], %s192
        %s194 = sand.u32 %s50, 1
        %s195 = smul.addr %s194, 16
        %s196 = scalar_lea.vmem [#allocation2], %s195
        // Predicated region
        $region29: #{tpu_custom_call.1} parent=27 // pred_check
          %p197 = pneg %p63
        $region30: #{tpu_custom_call.1} parent=27 // pred_check_branch
          %199 = sbr.rel (%p197) target = $region32
        $region31: #{tpu_custom_call.1} parent=27 // pred_region
          %200 = dma.done %s193, 256
        $region32: #{tpu_custom_call.1} parent=27 // pred_fallthru
          _
        %s201 = sand.u32 %s78, 1
        %s202 = scalar_lea.sflag [#allocation6], %s201
        %s203 = sand.u32 %s78, 1
        %s204 = smul.addr %s203, 16
        %s205 = scalar_lea.vmem [#allocation5], %s204
        // Predicated region
        $region33: #{tpu_custom_call.1} parent=27 // pred_check
          %p206 = pneg %p91
        $region34: #{tpu_custom_call.1} parent=27 // pred_check_branch
          %208 = sbr.rel (%p206) target = $region36
        $region35: #{tpu_custom_call.1} parent=27 // pred_region
          %209 = dma.done %s202, 256
        $region36: #{tpu_custom_call.1} parent=27 // pred_fallthru
          _
        %s210 = sand.u32 %s50, 1
        %s211 = scalar_lea.sflag [#allocation3], %s210
        %s212 = sand.u32 %s50, 1
        %s213 = smul.addr %s212, 16
        %s214 = scalar_lea.vmem [#allocation2], %s213
        %p215 = pneg %p63
        %p216 = pneg %p60
        %s217 = sand.u32 %s78, 1
        %s218 = scalar_lea.sflag [#allocation6], %s217
        %s219 = sand.u32 %s78, 1
        %s220 = smul.addr %s219, 16
        %s221 = scalar_lea.vmem [#allocation5], %s220
        %p222 = pneg %p91
        %p223 = pneg %p88
        %p224 = pneg %p117
        %p225 = pneg %p114
        %s226 = sand.u32 %s104, 1
        %s227 = scalar_lea.sflag [#allocation4], %s226
        %s228 = sand.u32 %s104, 1
        %s229 = smul.addr %s228, 8
        %s230 = scalar_lea.vmem [#allocation7], %s229
        %p231 = scmp.eq.s32.totalorder %s26, 0
        %s232 = ssub.s32 %s26, 1
        %s233 = scalar_select %p231, 9, %s232
        %s234 = smul.u32 2, %s27
        %s235 = smul.u32 2, %s27
        %p236 = scmp.eq.s32.totalorder %s27, 0
        // Predicated region
        $region37: #{tpu_custom_call.1} parent=27 // pred_check
          %p237 = pneg %p236
        $region38: #{tpu_custom_call.1} parent=27 // pred_check_branch
          %239 = sbr.rel (%p237) target = $region40
        $region39: #{tpu_custom_call.1} parent=27 // pred_region
          %240 = vst [vmem:[%s230] sm:$0xff] 0.0
        $region40: #{tpu_custom_call.1} parent=27 // pred_fallthru
          _
        %v241 = vld [vmem:[%s196] sm:$0xff]
        %v242 = vld [vmem:[%s196 + $0x8] sm:$0xff]
        %v243 = vld [vmem:[%s205] sm:$0xff]
        %v244 = vld [vmem:[%s205 + $0x8] sm:$0xff]
        %v245 = vsub.f32 %v241, %v243
        %v246 = vsub.f32 %v242, %v244
        %v247 = vmul.f32 %v245, %v245
        %v248 = vmul.f32 %v246, %v246
        %v249 = vld [vmem:[%s230] sm:$0xff]
        %v250 = vadd.f32 %v247, %v248
        %v251 = vadd.f32 %v249, %v250
        %252 = vst [vmem:[%s230] sm:$0xff] %v251
        %s253 = sand.u32 %s104, 1
        %s254 = scalar_lea.sflag [#allocation4], %s253
        %s255 = sand.u32 %s104, 1
        %s256 = smul.addr %s255, 8
        %s257 = scalar_lea.vmem [#allocation7], %s256
        // Predicated region
        $region41: #{tpu_custom_call.1} parent=27 // pred_check
          %p258 = pneg %p114
        $region42: #{tpu_custom_call.1} parent=27 // pred_check_branch
          %260 = sbr.rel (%p258) target = $region44
        $region43: #{tpu_custom_call.1} parent=27 // pred_region
          %s262 = ssub.s32 128, 128
          %263 = vsyncadd %s254, %s262
          %s264 = smul.addr %s26, 128
          %s265 = scalar_lea.hbm %s2, %s264
          %s267 = sshll.u32 %s257, 4
          %s268 = int_to_ptr.vmem [resolvable:$true] %s267
          %270 = dma.vmem_to_hbm [thread:$0]  %s268, 128, %s265, %s254
        $region44: #{tpu_custom_call.1} parent=27 // pred_fallthru
          _
      $region28: #{tpu_custom_call.1} parent=5 // pred_fallthru
        _
      %p271 = scmp.le.s32.totalorder 2, %s17
      // Predicated region
      $region45: #{tpu_custom_call.1} parent=5 // pred_check
        %p272 = pneg %p271
      $region46: #{tpu_custom_call.1} parent=5 // pred_check_branch
        %274 = sbr.rel (%p272) target = $region48
      $region47: #{tpu_custom_call.1} parent=5 // pred_region
        %s275 = ssub.s32 %s17, 2
        // Predicated region
        $region49: #{tpu_custom_call.1} parent=47 // pred_check
          %p276 = pneg %p120
        $region50: #{tpu_custom_call.1} parent=47 // pred_check_branch
          %278 = sbr.rel (%p276) target = $region52
        $region51: #{tpu_custom_call.1} parent=47 // pred_region
          %s279 = sand.u32 %s105, 1
          %s280 = scalar_lea.sflag [#allocation4], %s279
          %s281 = sand.u32 %s105, 1
          %s282 = smul.addr %s281, 8
          %s283 = scalar_lea.vmem [#allocation7], %s282
          %284 = dma.done %s280, 128
        $region52: #{tpu_custom_call.1} parent=47 // pred_fallthru
          _
      $region48: #{tpu_custom_call.1} parent=5 // pred_fallthru
        _
    $region6: #{tpu_custom_call.1} parent=1 // loop_footer
      %s21 = sadd.s32 1, %s17
    $region7: #{tpu_custom_call.1} parent=1 // loop_footer_branch
      %16 = sbr.rel target = $region3
    $region8: #{tpu_custom_call.1} parent=1 // loop_exit
      _
    %285 = vsyncpa [#allocation3], 1
    %s286 = scalar_lea.sflag [#allocation3], 1
    %287 = vsyncpa %s286, 1
    %288 = vsyncpa [#allocation6], 1
    %s289 = scalar_lea.sflag [#allocation6], 1
    %290 = vsyncpa %s289, 1
    %291 = vsyncpa [#allocation4], 1
    %s292 = scalar_lea.sflag [#allocation4], 1
    %293 = vsyncpa %s292, 1

</llo_original>
